<compile_context>
chip_gen: v7x
topology: tpu7x:2x2x1
jax: 0.10.0
libtpu: 0.0.40
codegen_flags: <defaults>
</compile_context>

<pallas_src>
import functools

import jax
import jax.numpy as jnp
from jax.experimental import pallas as pl
from jax.experimental.pallas import tpu as pltpu

LANE = 128
SUBLANE = 8

# 2048x128 f32 = 1 MiB per stream buffer; 4 double-buffered inputs = 8 MiB.
# Fits v5e's 16 MiB default scoped VMEM; ~85% HBM-roofline tier on v6e/v7x.
# (4096 would need vmem_limit_bytes raised on v5e for marginal extra gain.)
MAX_TILE_ROWS = 2048

# Leading "parallel" grid axis: on v7x (2 TensorCores/chip) the row stream is
# sharded across both cores (per-core partial sums combined in the wrapper);
# on v5e/v6e it is just a serial outer loop of length 2 with negligible cost.
NCORES = 2


def _sublane_mult(dtype):
    """Minimum sublane multiple for this dtype's packed (x,128) tile."""
    itemsize = jnp.dtype(dtype).itemsize
    return max(SUBLANE, SUBLANE * 4 // max(itemsize, 1))  # f32:8 bf16:16 i8:32


def _to_slab(x, pad_value, row_mult):
    """Lane-dense (rows, LANE) view; rows a multiple of row_mult; no dtype cast.

    A pure reshape when numel is already a multiple of row_mult*128; otherwise
    a small constant pad is appended (0.0 for L1 slabs so |0-0| = 0, 1.0 for
    discriminator slabs so (1-1)^2 = 0). Normalizers use original counts.
    """
    flat = jnp.ravel(x)
    n = flat.shape[0]
    pad = (-n) % (row_mult * LANE)
    if pad:
        # TODO(synk): for odd image sizes this materializes a padded copy; an
        # element-level in-kernel tail mask would avoid it.
        flat = jnp.pad(flat, (0, pad), constant_values=pad_value)
    return flat.reshape(-1, LANE)


def _accumulate_pair(acc_ref, real_ref, rec_ref, g, *, tile_rows, rows,
                     max_blocks):
    """acc += sublane-folded (8,128) |rec - real| for global row-block g."""
    nblk = -(-rows // tile_rows)
    rem = rows - (nblk - 1) * tile_rows          # valid rows in the last block
    ragged = rem != tile_rows
    n_full = nblk - 1 if ragged else nblk

    def diff():
        return rec_ref[...].astype(jnp.float32) - real_ref[...].astype(jnp.float32)

    def fold(d):
        # (tile_rows,128) -> (tile_rows/8, 8, 128) is vreg-tile aligned (no
        # copy); the leading-axis sum is plain VALU adds (no XLU).
        return jnp.abs(d).reshape(-1, SUBLANE, LANE).sum(axis=0)

    if not ragged and nblk == max_blocks:
        # Every grid step maps to a distinct full block: no masking, no gating.
        acc_ref[...] += fold(diff())
        return

    @pl.when(g < n_full)
    def _full():                                  # steady state: unmasked
        acc_ref[...] += fold(diff())

    if ragged:
        @pl.when(g == nblk - 1)
        def _partial():                           # ragged tail: masked once
            row = jax.lax.broadcasted_iota(jnp.int32, (tile_rows, LANE), 0)
            acc_ref[...] += fold(jnp.where(row < rem, diff(), 0.0))
    # Steps with g >= nblk (index_map clamped) contribute nothing.


def _cyclegan_loss_kernel(real_x_ref, real_y_ref, rec_x_ref, rec_y_ref,
                          dy_ref, dx_ref, out_ref, acc_x_ref, acc_y_ref, *,
                          lambda_cycle, inv_nx, inv_ny, inv_ndy, inv_ndx,
                          tile_rows, rows_x, rows_y, steps_per_core,
                          max_blocks):
    c = pl.program_id(0)                 # core / partial-sum index
    i = pl.program_id(1)                 # row-block stream index (per core)
    g = c * steps_per_core + i           # global row-block index

    @pl.when(i == 0)
    def _init():
        acc_x_ref[...] = jnp.zeros_like(acc_x_ref)
        acc_y_ref[...] = jnp.zeros_like(acc_y_ref)

    # Cycle-consistency L1: per-lane elementwise work folded into (8,128).
    _accumulate_pair(acc_x_ref, real_x_ref, rec_x_ref, g,
                     tile_rows=tile_rows, rows=rows_x, max_blocks=max_blocks)
    _accumulate_pair(acc_y_ref, real_y_ref, rec_y_ref, g,
                     tile_rows=tile_rows, rows=rows_y, max_blocks=max_blocks)

    @pl.when(i == steps_per_core - 1)
    def _finalize():
        # Single cross-lane reduce per core, paid once.
        cycle = (jnp.sum(acc_x_ref[...]) * inv_nx
                 + jnp.sum(acc_y_ref[...]) * inv_ny)
        # Adversarial MSE against all-ones targets on the tiny resident
        # discriminator slabs (padded with 1.0 -> padding contributes zero).
        ey = dy_ref[...].astype(jnp.float32) - 1.0
        ex = dx_ref[...].astype(jnp.float32) - 1.0
        adv = jnp.sum(ey * ey) * inv_ndy + jnp.sum(ex * ex) * inv_ndx
        total = lambda_cycle * cycle + jnp.where(c == 0, adv, 0.0)
        out_ref[...] = jnp.broadcast_to(total, out_ref.shape)


def cyclegan_loss(real_x, real_y, fake_y, fake_x, rec_x, rec_y,
                  d_y_fake, d_x_fake, lambda_cycle=10.0):
    # fake_y / fake_x do not enter the loss (same as the PyTorch module).
    del fake_y, fake_x

    inv_nx = 1.0 / float(real_x.size)
    inv_ny = 1.0 / float(real_y.size)
    inv_ndy = 1.0 / float(d_y_fake.size)
    inv_ndx = 1.0 / float(d_x_fake.size)

    # Common row multiple so paired slabs share row counts even for bf16/int8.
    row_mult = max(_sublane_mult(t.dtype)
                   for t in (real_x, real_y, rec_x, rec_y))
    rx = _to_slab(real_x, 0.0, row_mult)
    ry = _to_slab(real_y, 0.0, row_mult)
    cx = _to_slab(rec_x, 0.0, row_mult)
    cy = _to_slab(rec_y, 0.0, row_mult)
    dys = _to_slab(d_y_fake, 1.0, _sublane_mult(d_y_fake.dtype))
    dxs = _to_slab(d_x_fake, 1.0, _sublane_mult(d_x_fake.dtype))

    rows_x, rows_y = rx.shape[0], ry.shape[0]
    tile_rows = min(MAX_TILE_ROWS, rows_x, rows_y)   # multiple of row_mult
    nsteps_total = -(-max(rows_x, rows_y) // tile_rows)
    steps_per_core = -(-nsteps_total // NCORES)
    max_blocks = NCORES * steps_per_core
    nblk_x = -(-rows_x // tile_rows)
    nblk_y = -(-rows_y // tile_rows)

    def row_spec(nblk):
        if nblk == max_blocks:
            return pl.BlockSpec((tile_rows, LANE),
                                lambda c, i: (c * steps_per_core + i, 0))
        return pl.BlockSpec(
            (tile_rows, LANE),
            lambda c, i: (jnp.minimum(c * steps_per_core + i, nblk - 1), 0))

    def resident_spec(slab):
        return pl.BlockSpec(slab.shape, lambda c, i: (0, 0))

    kernel = functools.partial(
        _cyclegan_loss_kernel,
        lambda_cycle=float(lambda_cycle),
        inv_nx=inv_nx, inv_ny=inv_ny, inv_ndy=inv_ndy, inv_ndx=inv_ndx,
        tile_rows=tile_rows, rows_x=rows_x, rows_y=rows_y,
        steps_per_core=steps_per_core, max_blocks=max_blocks)

    bytes_accessed = int(real_x.nbytes + real_y.nbytes + rec_x.nbytes
                         + rec_y.nbytes + d_y_fake.nbytes + d_x_fake.nbytes
                         + NCORES * SUBLANE * LANE * 4)
    flops = int(3 * (real_x.size + real_y.size)
                + 3 * (d_y_fake.size + d_x_fake.size) + 64)

    partials = pl.pallas_call(
        kernel,
        out_shape=jax.ShapeDtypeStruct((NCORES, SUBLANE, LANE), jnp.float32),
        grid=(NCORES, steps_per_core),
        in_specs=[row_spec(nblk_x), row_spec(nblk_y),
                  row_spec(nblk_x), row_spec(nblk_y),
                  resident_spec(dys), resident_spec(dxs)],
        out_specs=pl.BlockSpec((1, SUBLANE, LANE), lambda c, i: (c, 0, 0)),
        scratch_shapes=[pltpu.VMEM((SUBLANE, LANE), jnp.float32),
                        pltpu.VMEM((SUBLANE, LANE), jnp.float32)],
        compiler_params=pltpu.CompilerParams(
            dimension_semantics=("parallel", "arbitrary")),
        cost_estimate=pl.CostEstimate(flops=flops, transcendentals=0,
                                      bytes_accessed=bytes_accessed),
    )(rx, ry, cx, cy, dys, dxs)

    # Combine per-core partial sums (core 0's partial also carries the
    # adversarial term).
    return jnp.sum(partials[:, 0, 0])


def cyclegan_loss_ref(real_x, real_y, fake_y, fake_x, rec_x, rec_y,
                      d_y_fake, d_x_fake, lambda_cycle=10.0):
    adv_g = jnp.mean((d_y_fake - 1.0) ** 2)
    adv_f = jnp.mean((d_x_fake - 1.0) ** 2)
    cycle_x = jnp.mean(jnp.abs(rec_x - real_x))
    cycle_y = jnp.mean(jnp.abs(rec_y - real_y))
    return adv_g + adv_f + lambda_cycle * (cycle_x + cycle_y)


if __name__ == "__main__":
    key = jax.random.PRNGKey(0)
    ks = jax.random.split(key, 8)

    # NCHW shapes consistent with CycleGAN: images (B, C, H, W),
    # PatchGAN discriminator outputs (B, 1, H', W').
    B, C, H, W = 2, 4, 16, 16
    Hp, Wp = 16, 16

    real_x = jax.random.normal(ks[0], (B, C, H, W), jnp.float32)
    real_y = jax.random.normal(ks[1], (B, C, H, W), jnp.float32)
    fake_y = jax.random.normal(ks[2], (B, C, H, W), jnp.float32)
    fake_x = jax.random.normal(ks[3], (B, C, H, W), jnp.float32)
    rec_x = jax.random.normal(ks[4], (B, C, H, W), jnp.float32)
    rec_y = jax.random.normal(ks[5], (B, C, H, W), jnp.float32)
    d_y_fake = jax.random.normal(ks[6], (B, 1, Hp, Wp), jnp.float32)
    d_x_fake = jax.random.normal(ks[7], (B, 1, Hp, Wp), jnp.float32)

    loss = cyclegan_loss(real_x, real_y, fake_y, fake_x, rec_x, rec_y,
                         d_y_fake, d_x_fake, lambda_cycle=10.0)
    loss = jax.block_until_ready(loss)

    ref = cyclegan_loss_ref(real_x, real_y, fake_y, fake_x, rec_x, rec_y,
                            d_y_fake, d_x_fake, lambda_cycle=10.0)
    assert jnp.allclose(loss, ref, rtol=1e-5, atol=1e-5), (loss, ref)

    print("KERNEL_OK")
</pallas_src>

<mosaic_0001>
module attributes {stable_mosaic.version = 11 : i64} {
  func.func @_cyclegan_loss_kernel(%arg0: i32, %arg1: i32, %arg2: memref<16x128xf32, #tpu.memory_space<vmem>>, %arg3: memref<16x128xf32, #tpu.memory_space<vmem>>, %arg4: memref<16x128xf32, #tpu.memory_space<vmem>>, %arg5: memref<16x128xf32, #tpu.memory_space<vmem>>, %arg6: memref<8x128xf32, #tpu.memory_space<vmem>>, %arg7: memref<8x128xf32, #tpu.memory_space<vmem>>, %arg8: memref<1x8x128xf32, #tpu.memory_space<vmem>>, %arg9: memref<8x128xf32, #tpu.memory_space<vmem>>, %arg10: memref<8x128xf32, #tpu.memory_space<vmem>>) attributes {dimension_semantics = [#tpu.dimension_semantics<parallel>, #tpu.dimension_semantics<arbitrary>], iteration_bounds = array<i64: 2, 1>, scalar_prefetch = 0 : i64, scratch_operands = 2 : i64, tpu.core_type = #tpu.core_type<tc>, window_params = [{transform_indices = @transform_0, window_bounds = array<i64: 16, 128>}, {transform_indices = @transform_1, window_bounds = array<i64: 16, 128>}, {transform_indices = @transform_2, window_bounds = array<i64: 16, 128>}, {transform_indices = @transform_3, window_bounds = array<i64: 16, 128>}, {pipeline_mode = #tpu.pipeline_mode<synchronous>, transform_indices = @transform_4, window_bounds = array<i64: 8, 128>}, {pipeline_mode = #tpu.pipeline_mode<synchronous>, transform_indices = @transform_5, window_bounds = array<i64: 8, 128>}, {transform_indices = @transform_6, window_bounds = array<i64: 1, 8, 128>}]} {
    %c1_i32 = arith.constant 1 : i32
    %0 = arith.muli %arg0, %c1_i32 : i32
    %1 = arith.addi %0, %arg1 : i32
    %c0_i32 = arith.constant 0 : i32
    %2 = arith.cmpi eq, %arg1, %c0_i32 : i32
    %3 = arith.extui %2 : i1 to i32
    %c0_i32_0 = arith.constant 0 : i32
    %4 = arith.cmpi ne, %3, %c0_i32_0 : i32
    scf.if %4 {
      %cst = arith.constant 0.000000e+00 : f32
      %14 = vector.broadcast %cst : f32 to vector<8x128xf32>
      %c0 = arith.constant 0 : index
      %c0_7 = arith.constant 0 : index
      %15 = vector.load %arg9[%c0, %c0_7] : memref<8x128xf32, #tpu.memory_space<vmem>>, vector<8x128xf32>
      tpu.vector_store %arg9[%c0, %c0_7], %14 {strides = array<i32>} : memref<8x128xf32, #tpu.memory_space<vmem>>, vector<8x128xf32>,
      %cst_8 = arith.constant 0.000000e+00 : f32
      %16 = vector.broadcast %cst_8 : f32 to vector<8x128xf32>
      %c0_9 = arith.constant 0 : index
      %c0_10 = arith.constant 0 : index
      %17 = vector.load %arg10[%c0_9, %c0_10] : memref<8x128xf32, #tpu.memory_space<vmem>>, vector<8x128xf32>
      tpu.vector_store %arg10[%c0_9, %c0_10], %16 {strides = array<i32>} : memref<8x128xf32, #tpu.memory_space<vmem>>, vector<8x128xf32>,
    } else {
    }
    %c1_i32_1 = arith.constant 1 : i32
    %5 = arith.cmpi slt, %1, %c1_i32_1 : i32
    %6 = arith.extui %5 : i1 to i32
    %c0_i32_2 = arith.constant 0 : i32
    %7 = arith.cmpi ne, %6, %c0_i32_2 : i32
    scf.if %7 {
      %c0 = arith.constant 0 : index
      %c0_7 = arith.constant 0 : index
      %14 = vector.load %arg9[%c0, %c0_7] : memref<8x128xf32, #tpu.memory_space<vmem>>, vector<8x128xf32>
      %c0_8 = arith.constant 0 : index
      %c0_9 = arith.constant 0 : index
      %15 = vector.load %arg4[%c0_8, %c0_9] : memref<16x128xf32, #tpu.memory_space<vmem>>, vector<16x128xf32>
      %c0_10 = arith.constant 0 : index
      %c0_11 = arith.constant 0 : index
      %16 = vector.load %arg2[%c0_10, %c0_11] : memref<16x128xf32, #tpu.memory_space<vmem>>, vector<16x128xf32>
      %17 = arith.subf %15, %16 : vector<16x128xf32>
      %18 = math.absf %17 : vector<16x128xf32>
      %19 = vector.shape_cast %18 : vector<16x128xf32> to vector<2x8x128xf32>
      %cst = arith.constant dense<0.000000e+00> : vector<8x128xf32>
      %20 = vector.multi_reduction <add>, %19, %cst [0] : vector<2x8x128xf32> to vector<8x128xf32>
      %21 = arith.addf %14, %20 : vector<8x128xf32>
      %c0_12 = arith.constant 0 : index
      %c0_13 = arith.constant 0 : index
      %22 = vector.load %arg9[%c0_12, %c0_13] : memref<8x128xf32, #tpu.memory_space<vmem>>, vector<8x128xf32>
      tpu.vector_store %arg9[%c0_12, %c0_13], %21 {strides = array<i32>} : memref<8x128xf32, #tpu.memory_space<vmem>>, vector<8x128xf32>,
    } else {
    }
    %c1_i32_3 = arith.constant 1 : i32
    %8 = arith.cmpi slt, %1, %c1_i32_3 : i32
    %9 = arith.extui %8 : i1 to i32
    %c0_i32_4 = arith.constant 0 : i32
    %10 = arith.cmpi ne, %9, %c0_i32_4 : i32
    scf.if %10 {
      %c0 = arith.constant 0 : index
      %c0_7 = arith.constant 0 : index
      %14 = vector.load %arg10[%c0, %c0_7] : memref<8x128xf32, #tpu.memory_space<vmem>>, vector<8x128xf32>
      %c0_8 = arith.constant 0 : index
      %c0_9 = arith.constant 0 : index
      %15 = vector.load %arg5[%c0_8, %c0_9] : memref<16x128xf32, #tpu.memory_space<vmem>>, vector<16x128xf32>
      %c0_10 = arith.constant 0 : index
      %c0_11 = arith.constant 0 : index
      %16 = vector.load %arg3[%c0_10, %c0_11] : memref<16x128xf32, #tpu.memory_space<vmem>>, vector<16x128xf32>
      %17 = arith.subf %15, %16 : vector<16x128xf32>
      %18 = math.absf %17 : vector<16x128xf32>
      %19 = vector.shape_cast %18 : vector<16x128xf32> to vector<2x8x128xf32>
      %cst = arith.constant dense<0.000000e+00> : vector<8x128xf32>
      %20 = vector.multi_reduction <add>, %19, %cst [0] : vector<2x8x128xf32> to vector<8x128xf32>
      %21 = arith.addf %14, %20 : vector<8x128xf32>
      %c0_12 = arith.constant 0 : index
      %c0_13 = arith.constant 0 : index
      %22 = vector.load %arg10[%c0_12, %c0_13] : memref<8x128xf32, #tpu.memory_space<vmem>>, vector<8x128xf32>
      tpu.vector_store %arg10[%c0_12, %c0_13], %21 {strides = array<i32>} : memref<8x128xf32, #tpu.memory_space<vmem>>, vector<8x128xf32>,
    } else {
    }
    %c0_i32_5 = arith.constant 0 : i32
    %11 = arith.cmpi eq, %arg1, %c0_i32_5 : i32
    %12 = arith.extui %11 : i1 to i32
    %c0_i32_6 = arith.constant 0 : i32
    %13 = arith.cmpi ne, %12, %c0_i32_6 : i32
    scf.if %13 {
      %c0 = arith.constant 0 : index
      %c0_7 = arith.constant 0 : index
      %14 = vector.load %arg9[%c0, %c0_7] : memref<8x128xf32, #tpu.memory_space<vmem>>, vector<8x128xf32>
      %15 = vector.shape_cast %14 : vector<8x128xf32> to vector<1x8x128xf32>
      %cst = arith.constant dense<0.000000e+00> : vector<1xf32>
      %16 = vector.multi_reduction <add>, %15, %cst [1, 2] : vector<1x8x128xf32> to vector<1xf32>
      %17 = vector.shape_cast %16 : vector<1xf32> to vector<1x1x1xf32>
      %18 = vector.extract %17[0, 0, 0] : f32 from vector<1x1x1xf32>
      %cst_8 = arith.constant 4.8828125E-4 : f32
      %19 = arith.mulf %18, %cst_8 : f32
      %c0_9 = arith.constant 0 : index
      %c0_10 = arith.constant 0 : index
      %20 = vector.load %arg10[%c0_9, %c0_10] : memref<8x128xf32, #tpu.memory_space<vmem>>, vector<8x128xf32>
      %21 = vector.shape_cast %20 : vector<8x128xf32> to vector<1x8x128xf32>
      %cst_11 = arith.constant dense<0.000000e+00> : vector<1xf32>
      %22 = vector.multi_reduction <add>, %21, %cst_11 [1, 2] : vector<1x8x128xf32> to vector<1xf32>
      %23 = vector.shape_cast %22 : vector<1xf32> to vector<1x1x1xf32>
      %24 = vector.extract %23[0, 0, 0] : f32 from vector<1x1x1xf32>
      %cst_12 = arith.constant 4.8828125E-4 : f32
      %25 = arith.mulf %24, %cst_12 : f32
      %26 = arith.addf %19, %25 : f32
      %c0_13 = arith.constant 0 : index
      %c0_14 = arith.constant 0 : index
      %27 = vector.load %arg6[%c0_13, %c0_14] : memref<8x128xf32, #tpu.memory_space<vmem>>, vector<8x128xf32>
      %cst_15 = arith.constant 1.000000e+00 : f32
      %28 = vector.broadcast %cst_15 : f32 to vector<8x128xf32>
      %29 = arith.subf %27, %28 : vector<8x128xf32>
      %c0_16 = arith.constant 0 : index
      %c0_17 = arith.constant 0 : index
      %30 = vector.load %arg7[%c0_16, %c0_17] : memref<8x128xf32, #tpu.memory_space<vmem>>, vector<8x128xf32>
      %cst_18 = arith.constant 1.000000e+00 : f32
      %31 = vector.broadcast %cst_18 : f32 to vector<8x128xf32>
      %32 = arith.subf %30, %31 : vector<8x128xf32>
      %33 = arith.mulf %29, %29 : vector<8x128xf32>
      %34 = vector.shape_cast %33 : vector<8x128xf32> to vector<1x8x128xf32>
      %cst_19 = arith.constant dense<0.000000e+00> : vector<1xf32>
      %35 = vector.multi_reduction <add>, %34, %cst_19 [1, 2] : vector<1x8x128xf32> to vector<1xf32>
      %36 = vector.shape_cast %35 : vector<1xf32> to vector<1x1x1xf32>
      %37 = vector.extract %36[0, 0, 0] : f32 from vector<1x1x1xf32>
      %cst_20 = arith.constant 0.001953125 : f32
      %38 = arith.mulf %37, %cst_20 : f32
      %39 = arith.mulf %32, %32 : vector<8x128xf32>
      %40 = vector.shape_cast %39 : vector<8x128xf32> to vector<1x8x128xf32>
      %cst_21 = arith.constant dense<0.000000e+00> : vector<1xf32>
      %41 = vector.multi_reduction <add>, %40, %cst_21 [1, 2] : vector<1x8x128xf32> to vector<1xf32>
      %42 = vector.shape_cast %41 : vector<1xf32> to vector<1x1x1xf32>
      %43 = vector.extract %42[0, 0, 0] : f32 from vector<1x1x1xf32>
      %cst_22 = arith.constant 0.001953125 : f32
      %44 = arith.mulf %43, %cst_22 : f32
      %45 = arith.addf %38, %44 : f32
      %cst_23 = arith.constant 1.000000e+01 : f32
      %46 = arith.mulf %cst_23, %26 : f32
      %c0_i32_24 = arith.constant 0 : i32
      %47 = arith.cmpi eq, %arg0, %c0_i32_24 : i32
      %cst_25 = arith.constant 0.000000e+00 : f32
      %48 = arith.select %47, %45, %cst_25 : f32
      %49 = arith.addf %46, %48 : f32
      %50 = vector.broadcast %49 : f32 to vector<1x8x128xf32>
      %c0_26 = arith.constant 0 : index
      %c0_27 = arith.constant 0 : index
      %c0_28 = arith.constant 0 : index
      %51 = vector.load %arg8[%c0_26, %c0_27, %c0_28] : memref<1x8x128xf32, #tpu.memory_space<vmem>>, vector<1x8x128xf32>
      tpu.vector_store %arg8[%c0_26, %c0_27, %c0_28], %50 {strides = array<i32>} : memref<1x8x128xf32, #tpu.memory_space<vmem>>, vector<1x8x128xf32>,
    } else {
    }
    return
  }
  func.func @transform_0(%arg0: i32, %arg1: i32) -> (i32, i32) {
    %c1_i32 = arith.constant 1 : i32
    %0 = arith.muli %arg0, %c1_i32 : i32
    %1 = arith.addi %0, %arg1 : i32
    %c0_i32 = arith.constant 0 : i32
    %2 = arith.minsi %1, %c0_i32 : i32
    %c0_i32_0 = arith.constant 0 : i32
    %c0_i32_1 = arith.constant 0 : i32
    return %2, %c0_i32_0 : i32, i32
  }
  func.func @transform_1(%arg0: i32, %arg1: i32) -> (i32, i32) {
    %c1_i32 = arith.constant 1 : i32
    %0 = arith.muli %arg0, %c1_i32 : i32
    %1 = arith.addi %0, %arg1 : i32
    %c0_i32 = arith.constant 0 : i32
    %2 = arith.minsi %1, %c0_i32 : i32
    %c0_i32_0 = arith.constant 0 : i32
    %c0_i32_1 = arith.constant 0 : i32
    return %2, %c0_i32_0 : i32, i32
  }
  func.func @transform_2(%arg0: i32, %arg1: i32) -> (i32, i32) {
    %c1_i32 = arith.constant 1 : i32
    %0 = arith.muli %arg0, %c1_i32 : i32
    %1 = arith.addi %0, %arg1 : i32
    %c0_i32 = arith.constant 0 : i32
    %2 = arith.minsi %1, %c0_i32 : i32
    %c0_i32_0 = arith.constant 0 : i32
    %c0_i32_1 = arith.constant 0 : i32
    return %2, %c0_i32_0 : i32, i32
  }
  func.func @transform_3(%arg0: i32, %arg1: i32) -> (i32, i32) {
    %c1_i32 = arith.constant 1 : i32
    %0 = arith.muli %arg0, %c1_i32 : i32
    %1 = arith.addi %0, %arg1 : i32
    %c0_i32 = arith.constant 0 : i32
    %2 = arith.minsi %1, %c0_i32 : i32
    %c0_i32_0 = arith.constant 0 : i32
    %c0_i32_1 = arith.constant 0 : i32
    return %2, %c0_i32_0 : i32, i32
  }
  func.func @transform_4(%arg0: i32, %arg1: i32) -> (i32, i32) {
    %c0_i32 = arith.constant 0 : i32
    %c0_i32_0 = arith.constant 0 : i32
    %c0_i32_1 = arith.constant 0 : i32
    return %c0_i32, %c0_i32_0 : i32, i32
  }
  func.func @transform_5(%arg0: i32, %arg1: i32) -> (i32, i32) {
    %c0_i32 = arith.constant 0 : i32
    %c0_i32_0 = arith.constant 0 : i32
    %c0_i32_1 = arith.constant 0 : i32
    return %c0_i32, %c0_i32_0 : i32, i32
  }
  func.func @transform_6(%arg0: i32, %arg1: i32) -> (i32, i32, i32) {
    %c0_i32 = arith.constant 0 : i32
    %c0_i32_0 = arith.constant 0 : i32
    %c0_i32_1 = arith.constant 0 : i32
    return %arg0, %c0_i32, %c0_i32_0 : i32, i32, i32
  }
}

</mosaic_0001>

<llo_original>
// kernel: tpu_custom_call.1
$region0: #{tpu_custom_call.1}
  #allocation0 [shape = 'u32[]', space=smem, size = 0x4, offset = 0x4, fixed_abs, tag = 'smem constant byte address 0x4 - core index']
  #allocation1 [shape = 'u32[144,128]{1,0:T(1,128)}', space=vmem, size = 0x12000, scoped, tag = 'internal scratch']
  #allocation2 [shape = 'f32[8,128]{1,0:T(8,128)}', space=vmem, size = 0x1000, scoped, tag = 'scratch operand']
  #allocation3 [shape = 'f32[8,128]{1,0:T(8,128)}', space=vmem, size = 0x1000, scoped, tag = 'scratch operand']
  %s0 = inlined_call_operand.hbm [shape: f32[16,128], index: 0, kind: input, shape index: {}]
  %s1 = inlined_call_operand.hbm [shape: f32[16,128], index: 1, kind: input, shape index: {}]
  %s2 = inlined_call_operand.hbm [shape: f32[16,128], index: 2, kind: input, shape index: {}]
  %s3 = inlined_call_operand.hbm [shape: f32[16,128], index: 3, kind: input, shape index: {}]
  %s4 = inlined_call_operand.vmem [shape: f32[8,128], index: 4, kind: input, shape index: {}]
  %s5 = inlined_call_operand.vmem [shape: f32[8,128], index: 5, kind: input, shape index: {}]
  %s6 = inlined_call_operand.hbm [shape: f32[2,8,128], index: 6, kind: output, shape index: {}]
  %s7 = sld [smem:[#allocation0]]
  $region85: #{tpu_custom_call.1} parent=0
    _
  %s9 = ssub.s32 1, %s7
  %s10 = scalar_select 0, %s9, %s7
  $region1: #{tpu_custom_call.1} parent=0
    #allocation4 [shape = 'u8[16384]{0}', space=vmem, size = 0x4000, scoped, tag = 'input window, operand 0']
    #allocation5 [shape = 's32[2]{0}', space=sflag, size = 0x8, scoped, tag = 'scoped memory for tpu_custom_call.1']
    #allocation6 [shape = 's32[2]{0}', space=sflag, size = 0x8, scoped, tag = 'scoped memory for tpu_custom_call.1']
    #allocation7 [shape = 'u8[16384]{0}', space=vmem, size = 0x4000, scoped, tag = 'input window, operand 1']
    #allocation8 [shape = 's32[2]{0}', space=sflag, size = 0x8, scoped, tag = 'scoped memory for tpu_custom_call.1']
    #allocation9 [shape = 'u8[16384]{0}', space=vmem, size = 0x4000, scoped, tag = 'input window, operand 2']
    #allocation10 [shape = 'u8[16384]{0}', space=vmem, size = 0x4000, scoped, tag = 'input window, operand 3']
    #allocation11 [shape = 's32[2]{0}', space=sflag, size = 0x8, scoped, tag = 'scoped memory for tpu_custom_call.1']
    #allocation12 [shape = 'u8[8192]{0}', space=vmem, size = 0x2000, scoped, tag = 'output window, operand 0']
    %11 = vsyncpa [#allocation5], 0
    %s12 = scalar_lea.sflag [#allocation5], 1
    %13 = vsyncpa %s12, 0
    %14 = vsyncpa [#allocation8], 0
    %s15 = scalar_lea.sflag [#allocation8], 1
    %16 = vsyncpa %s15, 0
    %17 = vsyncpa [#allocation11], 0
    %s18 = scalar_lea.sflag [#allocation11], 1
    %19 = vsyncpa %s18, 0
    %20 = vsyncpa [#allocation6], 0
    %s21 = scalar_lea.sflag [#allocation6], 1
    %22 = vsyncpa %s21, 0
    loop: start=0, step=1, limit=4
    $region2: #{tpu_custom_call.1} parent=1 // loop_pre_header
      _
    $region3: #{tpu_custom_call.1} parent=1 // loop_header
      %s24 = sphi 0, %s28
      %p25 = scmp.ge.s32.totalorder %s24, 4
      %s31 = sphi 0, %s43
      %s32 = sphi 0, %s39
      %s33 = sphi 0, %s31
      %s34 = sphi 0, %s32
      %s35 = sphi 0, %s33
      %s36 = sphi 0, %s34
      %s52 = sphi 0, %s54
      %s55 = sphi 0, %s52
      %s56 = sphi 0, %s55
      %s72 = sphi 0, %s56
      %s84 = sphi 0, %s86
      %s87 = sphi 0, %s84
      %s88 = sphi 0, %s87
      %s104 = sphi 0, %s88
      %s116 = sphi 0, %s118
      %s119 = sphi 0, %s116
      %s120 = sphi 0, %s119
      %s136 = sphi 0, %s120
      %s148 = sphi 0, %s150
      %s151 = sphi 0, %s148
      %s152 = sphi 0, %s151
      %s168 = sphi 0, %s152
      %s172 = sphi 0, %s172
      %s174 = sphi 0, %s172
      %s175 = sphi 0, %s174
      %s189 = sphi 0, %s175
      %s193 = sphi 0, %s193
      %s195 = sphi 0, %s193
      %s196 = sphi 0, %s195
      %s210 = sphi 0, %s196
      %s216 = sphi 0, %s218
      %s219 = sphi 0, %s216
      %s220 = sphi 0, %s219
      %s236 = sphi 0, %s220
    $region4: #{tpu_custom_call.1} parent=1 // loop_header_branch
      %27 = sbr.rel (%p25) target = $region8
    $region5: #{tpu_custom_call.1} parent=1 // loop_body
      %s29 = ssub.s32 %s24, 1
      %s30 = ssub.s32 %s24, 2
      %s37 = sadd.s32 1, %s32
      %p38 = scmp.ge.s32.totalorder %s37, 1
      %s39 = scalar_select %p38, 0, %s37
      %s40 = sadd.s32 1, %s31
      %s41 = scalar_select %p38, %s40, %s31
      %p42 = scmp.ge.s32.totalorder %s41, 2
      %s43 = scalar_select %p42, 0, %s41
      %s44 = sadd.s32 %s31, %s32
      %p45 = scmp.lt.s32.totalorder %s44, 0
      %s46 = scalar_select %p45, %s44, 0
      %s47 = sadd.s32 %s43, %s39
      %p48 = scmp.lt.s32.totalorder %s47, 0
      %s49 = scalar_select %p48, %s47, 0
      %s50 = ssub.s32 %s46, %s49
      %p51 = scmp.eq.s32.totalorder %s50, 0
      %s53 = sadd.s32 %s52, 1
      %s54 = scalar_select %p51, %s52, %s53
      %p57 = pneg %p51
      %p58 = scmp.eq.s32.totalorder %s24, 1
      %p59 = por %p57, %p58
      %p60 = scmp.ne.s32.totalorder %s52, %s55
      %p61 = scmp.eq.s32.totalorder %s24, 0
      %p62 = por %p60, %p61
      %p63 = scmp.ne.s32.totalorder %s52, %s55
      %p64 = scmp.eq.s32.totalorder %s29, 1
      %p65 = por %p63, %p64
      %p66 = scmp.ne.s32.totalorder %s55, %s56
      %p67 = scmp.eq.s32.totalorder %s29, 0
      %p68 = por %p66, %p67
      %p69 = scmp.ne.s32.totalorder %s55, %s56
      %p70 = scmp.eq.s32.totalorder %s30, 1
      %p71 = por %p69, %p70
      %p73 = scmp.ne.s32.totalorder %s56, %s72
      %p74 = scmp.eq.s32.totalorder %s30, 0
      %p75 = por %p73, %p74
      %s76 = sadd.s32 %s31, %s32
      %p77 = scmp.lt.s32.totalorder %s76, 0
      %s78 = scalar_select %p77, %s76, 0
      %s79 = sadd.s32 %s43, %s39
      %p80 = scmp.lt.s32.totalorder %s79, 0
      %s81 = scalar_select %p80, %s79, 0
      %s82 = ssub.s32 %s78, %s81
      %p83 = scmp.eq.s32.totalorder %s82, 0
      %s85 = sadd.s32 %s84, 1
      %s86 = scalar_select %p83, %s84, %s85
      %p89 = pneg %p83
      %p90 = scmp.eq.s32.totalorder %s24, 1
      %p91 = por %p89, %p90
      %p92 = scmp.ne.s32.totalorder %s84, %s87
      %p93 = scmp.eq.s32.totalorder %s24, 0
      %p94 = por %p92, %p93
      %p95 = scmp.ne.s32.totalorder %s84, %s87
      %p96 = scmp.eq.s32.totalorder %s29, 1
      %p97 = por %p95, %p96
      %p98 = scmp.ne.s32.totalorder %s87, %s88
      %p99 = scmp.eq.s32.totalorder %s29, 0
      %p100 = por %p98, %p99
      %p101 = scmp.ne.s32.totalorder %s87, %s88
      %p102 = scmp.eq.s32.totalorder %s30, 1
      %p103 = por %p101, %p102
      %p105 = scmp.ne.s32.totalorder %s88, %s104
      %p106 = scmp.eq.s32.totalorder %s30, 0
      %p107 = por %p105, %p106
      %s108 = sadd.s32 %s31, %s32
      %p109 = scmp.lt.s32.totalorder %s108, 0
      %s110 = scalar_select %p109, %s108, 0
      %s111 = sadd.s32 %s43, %s39
      %p112 = scmp.lt.s32.totalorder %s111, 0
      %s113 = scalar_select %p112, %s111, 0
      %s114 = ssub.s32 %s110, %s113
      %p115 = scmp.eq.s32.totalorder %s114, 0
      %s117 = sadd.s32 %s116, 1
      %s118 = scalar_select %p115, %s116, %s117
      %p121 = pneg %p115
      %p122 = scmp.eq.s32.totalorder %s24, 1
      %p123 = por %p121, %p122
      %p124 = scmp.ne.s32.totalorder %s116, %s119
      %p125 = scmp.eq.s32.totalorder %s24, 0
      %p126 = por %p124, %p125
      %p127 = scmp.ne.s32.totalorder %s116, %s119
      %p128 = scmp.eq.s32.totalorder %s29, 1
      %p129 = por %p127, %p128
      %p130 = scmp.ne.s32.totalorder %s119, %s120
      %p131 = scmp.eq.s32.totalorder %s29, 0
      %p132 = por %p130, %p131
      %p133 = scmp.ne.s32.totalorder %s119, %s120
      %p134 = scmp.eq.s32.totalorder %s30, 1
      %p135 = por %p133, %p134
      %p137 = scmp.ne.s32.totalorder %s120, %s136
      %p138 = scmp.eq.s32.totalorder %s30, 0
      %p139 = por %p137, %p138
      %s140 = sadd.s32 %s31, %s32
      %p141 = scmp.lt.s32.totalorder %s140, 0
      %s142 = scalar_select %p141, %s140, 0
      %s143 = sadd.s32 %s43, %s39
      %p144 = scmp.lt.s32.totalorder %s143, 0
      %s145 = scalar_select %p144, %s143, 0
      %s146 = ssub.s32 %s142, %s145
      %p147 = scmp.eq.s32.totalorder %s146, 0
      %s149 = sadd.s32 %s148, 1
      %s150 = scalar_select %p147, %s148, %s149
      %p153 = pneg %p147
      %p154 = scmp.eq.s32.totalorder %s24, 1
      %p155 = por %p153, %p154
      %p156 = scmp.ne.s32.totalorder %s148, %s151
      %p157 = scmp.eq.s32.totalorder %s24, 0
      %p158 = por %p156, %p157
      %p159 = scmp.ne.s32.totalorder %s148, %s151
      %p160 = scmp.eq.s32.totalorder %s29, 1
      %p161 = por %p159, %p160
      %p162 = scmp.ne.s32.totalorder %s151, %s152
      %p163 = scmp.eq.s32.totalorder %s29, 0
      %p164 = por %p162, %p163
      %p165 = scmp.ne.s32.totalorder %s151, %s152
      %p166 = scmp.eq.s32.totalorder %s30, 1
      %p167 = por %p165, %p166
      %p169 = scmp.ne.s32.totalorder %s152, %s168
      %p170 = scmp.eq.s32.totalorder %s30, 0
      %p171 = por %p169, %p170
      %s173 = sadd.s32 %s172, 1
      %p176 = scmp.eq.s32.totalorder %s24, 1
      %p177 = scmp.ne.s32.totalorder %s172, %s174
      %p178 = scmp.eq.s32.totalorder %s24, 0
      %p179 = por %p177, %p178
      %p180 = scmp.ne.s32.totalorder %s172, %s174
      %p181 = scmp.eq.s32.totalorder %s29, 1
      %p182 = por %p180, %p181
      %p183 = scmp.ne.s32.totalorder %s174, %s175
      %p184 = scmp.eq.s32.totalorder %s29, 0
      %p185 = por %p183, %p184
      %p186 = scmp.ne.s32.totalorder %s174, %s175
      %p187 = scmp.eq.s32.totalorder %s30, 1
      %p188 = por %p186, %p187
      %p190 = scmp.ne.s32.totalorder %s175, %s189
      %p191 = scmp.eq.s32.totalorder %s30, 0
      %p192 = por %p190, %p191
      %s194 = sadd.s32 %s193, 1
      %p197 = scmp.eq.s32.totalorder %s24, 1
      %p198 = scmp.ne.s32.totalorder %s193, %s195
      %p199 = scmp.eq.s32.totalorder %s24, 0
      %p200 = por %p198, %p199
      %p201 = scmp.ne.s32.totalorder %s193, %s195
      %p202 = scmp.eq.s32.totalorder %s29, 1
      %p203 = por %p201, %p202
      %p204 = scmp.ne.s32.totalorder %s195, %s196
      %p205 = scmp.eq.s32.totalorder %s29, 0
      %p206 = por %p204, %p205
      %p207 = scmp.ne.s32.totalorder %s195, %s196
      %p208 = scmp.eq.s32.totalorder %s30, 1
      %p209 = por %p207, %p208
      %p211 = scmp.ne.s32.totalorder %s196, %s210
      %p212 = scmp.eq.s32.totalorder %s30, 0
      %p213 = por %p211, %p212
      %s214 = ssub.s32 %s31, %s43
      %p215 = scmp.eq.s32.totalorder %s214, 0
      %s217 = sadd.s32 %s216, 1
      %s218 = scalar_select %p215, %s216, %s217
      %p221 = pneg %p215
      %p222 = scmp.eq.s32.totalorder %s24, 1
      %p223 = por %p221, %p222
      %p224 = scmp.ne.s32.totalorder %s216, %s219
      %p225 = scmp.eq.s32.totalorder %s24, 0
      %p226 = por %p224, %p225
      %p227 = scmp.ne.s32.totalorder %s216, %s219
      %p228 = scmp.eq.s32.totalorder %s29, 1
      %p229 = por %p227, %p228
      %p230 = scmp.ne.s32.totalorder %s219, %s220
      %p231 = scmp.eq.s32.totalorder %s29, 0
      %p232 = por %p230, %p231
      %p233 = scmp.ne.s32.totalorder %s219, %s220
      %p234 = scmp.eq.s32.totalorder %s30, 1
      %p235 = por %p233, %p234
      %p237 = scmp.ne.s32.totalorder %s220, %s236
      %p238 = scmp.eq.s32.totalorder %s30, 0
      %p239 = por %p237, %p238
      %p240 = scmp.le.s32.totalorder 1, %s24
      %p241 = scmp.lt.s32.totalorder %s24, 3
      %p242 = pnand %p240, %p241
      %p243 = pneg %p242
      // Predicated region
      $region9: #{tpu_custom_call.1} parent=5 // pred_check
        _
      $region10: #{tpu_custom_call.1} parent=5 // pred_check_branch
        %245 = sbr.rel (%p242) target = $region12
      $region11: #{tpu_custom_call.1} parent=5 // pred_region
        %s246 = ssub.s32 %s24, 1
        // Predicated region
        $region13: #{tpu_custom_call.1} parent=11 // pred_check
          %p247 = pneg %p185
        $region14: #{tpu_custom_call.1} parent=11 // pred_check_branch
          %249 = sbr.rel (%p247) target = $region16
        $region15: #{tpu_custom_call.1} parent=11 // pred_region
          _
        $region16: #{tpu_custom_call.1} parent=11 // pred_fallthru
          _
        // Predicated region
        $region17: #{tpu_custom_call.1} parent=11 // pred_check
          %p250 = pneg %p206
        $region18: #{tpu_custom_call.1} parent=11 // pred_check_branch
          %252 = sbr.rel (%p250) target = $region20
        $region19: #{tpu_custom_call.1} parent=11 // pred_region
          _
        $region20: #{tpu_custom_call.1} parent=11 // pred_fallthru
          _
      $region12: #{tpu_custom_call.1} parent=5 // pred_fallthru
        _
      %p253 = scmp.lt.s32.totalorder %s24, 2
      // Predicated region
      $region21: #{tpu_custom_call.1} parent=5 // pred_check
        %p254 = pneg %p253
      $region22: #{tpu_custom_call.1} parent=5 // pred_check_branch
        %256 = sbr.rel (%p254) target = $region24
      $region23: #{tpu_custom_call.1} parent=5 // pred_region
        // Predicated region
        $region25: #{tpu_custom_call.1} parent=23 // pred_check
          %p257 = pneg %p62
        $region26: #{tpu_custom_call.1} parent=23 // pred_check_branch
          %259 = sbr.rel (%p257) target = $region28
        $region27: #{tpu_custom_call.1} parent=23 // pred_region
          %s260 = sand.u32 %s52, 1
          %s261 = scalar_lea.sflag [#allocation5], %s260
          %s262 = sand.u32 %s52, 1
          %s263 = smul.addr %s262, 16
          %s264 = scalar_lea.vmem [#allocation4], %s263
          %s265 = sadd.s32 %s31, %s32
          %p266 = scmp.lt.s32.totalorder %s265, 0
          %s267 = scalar_select %p266, %s265, 0
          %s268 = smul.u32 2, %s267
          %s270 = ssub.s32 256, 256
          %271 = vsyncadd %s261, %s270
          %s272 = smul.addr %s268, 128
          %s273 = scalar_lea.hbm %s0, %s272
          %s274 = sshll.u32 %s264, 4
          %s275 = int_to_ptr.vmem [resolvable:$true] %s274
          %280 = dma.hbm_to_vmem [thread:$0]  %s273, 256, %s275, %s261, 128, 128, 8
        $region28: #{tpu_custom_call.1} parent=23 // pred_fallthru
          _
        // Predicated region
        $region29: #{tpu_custom_call.1} parent=23 // pred_check
          %p281 = pneg %p94
        $region30: #{tpu_custom_call.1} parent=23 // pred_check_branch
          %283 = sbr.rel (%p281) target = $region32
        $region31: #{tpu_custom_call.1} parent=23 // pred_region
          %s284 = sand.u32 %s24, 1
          %s285 = scalar_lea.sflag [#allocation8], %s284
          %s286 = sand.u32 %s84, 1
          %s287 = smul.addr %s286, 16
          %s288 = scalar_lea.vmem [#allocation7], %s287
          %s289 = sadd.s32 %s31, %s32
          %p290 = scmp.lt.s32.totalorder %s289, 0
          %s291 = scalar_select %p290, %s289, 0
          %s292 = smul.u32 2, %s291
          %s294 = ssub.s32 256, 256
          %295 = vsyncadd %s285, %s294
          %s296 = smul.addr %s292, 128
          %s297 = scalar_lea.hbm %s1, %s296
          %s298 = sshll.u32 %s288, 4
          %s299 = int_to_ptr.vmem [resolvable:$true] %s298
          %304 = dma.hbm_to_vmem [thread:$0]  %s297, 256, %s299, %s285, 128, 128, 8
        $region32: #{tpu_custom_call.1} parent=23 // pred_fallthru
          _
        // Predicated region
        $region33: #{tpu_custom_call.1} parent=23 // pred_check
          %p305 = pneg %p126
        $region34: #{tpu_custom_call.1} parent=23 // pred_check_branch
          %307 = sbr.rel (%p305) target = $region36
        $region35: #{tpu_custom_call.1} parent=23 // pred_region
          %s308 = sand.u32 %s24, 1
          %s309 = scalar_lea.sflag [#allocation8], %s308
          %s310 = sand.u32 %s116, 1
          %s311 = smul.addr %s310, 16
          %s312 = scalar_lea.vmem [#allocation9], %s311
          %s313 = sadd.s32 %s31, %s32
          %p314 = scmp.lt.s32.totalorder %s313, 0
          %s315 = scalar_select %p314, %s313, 0
          %s316 = smul.u32 2, %s315
          %s318 = ssub.s32 256, 256
          %319 = vsyncadd %s309, %s318
          %s320 = smul.addr %s316, 128
          %s321 = scalar_lea.hbm %s2, %s320
          %s322 = sshll.u32 %s312, 4
          %s323 = int_to_ptr.vmem [resolvable:$true] %s322
          %328 = dma.hbm_to_vmem [thread:$0]  %s321, 256, %s323, %s309, 128, 128, 8
        $region36: #{tpu_custom_call.1} parent=23 // pred_fallthru
          _
        // Predicated region
        $region37: #{tpu_custom_call.1} parent=23 // pred_check
          %p329 = pneg %p158
        $region38: #{tpu_custom_call.1} parent=23 // pred_check_branch
          %331 = sbr.rel (%p329) target = $region40
        $region39: #{tpu_custom_call.1} parent=23 // pred_region
          %s332 = sand.u32 %s148, 1
          %s333 = scalar_lea.sflag [#allocation11], %s332
          %s334 = sand.u32 %s148, 1
          %s335 = smul.addr %s334, 16
          %s336 = scalar_lea.vmem [#allocation10], %s335
          %s337 = sadd.s32 %s31, %s32
          %p338 = scmp.lt.s32.totalorder %s337, 0
          %s339 = scalar_select %p338, %s337, 0
          %s340 = smul.u32 2, %s339
          %s342 = ssub.s32 256, 256
          %343 = vsyncadd %s333, %s342
          %s344 = smul.addr %s340, 128
          %s345 = scalar_lea.hbm %s3, %s344
          %s346 = sshll.u32 %s336, 4
          %s347 = int_to_ptr.vmem [resolvable:$true] %s346
          %352 = dma.hbm_to_vmem [thread:$0]  %s345, 256, %s347, %s333, 128, 128, 8
        $region40: #{tpu_custom_call.1} parent=23 // pred_fallthru
          _
      $region24: #{tpu_custom_call.1} parent=5 // pred_fallthru
        _
      %p353 = scmp.le.s32.totalorder 1, %s24
      %p354 = scmp.lt.s32.totalorder %s24, 3
      %p355 = pnand %p353, %p354
      %p356 = pneg %p355
      // Predicated region
      $region41: #{tpu_custom_call.1} parent=5 // pred_check
        _
      $region42: #{tpu_custom_call.1} parent=5 // pred_check_branch
        %358 = sbr.rel (%p355) target = $region44
      $region43: #{tpu_custom_call.1} parent=5 // pred_region
        %s359 = ssub.s32 %s24, 1
        %s360 = sand.u32 %s55, 1
        %s361 = scalar_lea.sflag [#allocation5], %s360
        %s362 = sand.u32 %s55, 1
        %s363 = smul.addr %s362, 16
        %s364 = scalar_lea.vmem [#allocation4], %s363
        // Predicated region
        $region45: #{tpu_custom_call.1} parent=43 // pred_check
          %p365 = pneg %p68
        $region46: #{tpu_custom_call.1} parent=43 // pred_check_branch
          %367 = sbr.rel (%p365) target = $region48
        $region47: #{tpu_custom_call.1} parent=43 // pred_region
          %368 = dma.done %s361, 256
        $region48: #{tpu_custom_call.1} parent=43 // pred_fallthru
          _
        %s369 = sand.u32 %s29, 1
        %s370 = scalar_lea.sflag [#allocation8], %s369
        %s371 = sand.u32 %s87, 1
        %s372 = smul.addr %s371, 16
        %s373 = scalar_lea.vmem [#allocation7], %s372
        // Predicated region
        $region49: #{tpu_custom_call.1} parent=43 // pred_check
          %p374 = pneg %p100
        $region50: #{tpu_custom_call.1} parent=43 // pred_check_branch
          %376 = sbr.rel (%p374) target = $region52
        $region51: #{tpu_custom_call.1} parent=43 // pred_region
          %377 = dma.done %s370, 256
        $region52: #{tpu_custom_call.1} parent=43 // pred_fallthru
          _
        %s378 = sand.u32 %s29, 1
        %s379 = scalar_lea.sflag [#allocation8], %s378
        %s380 = sand.u32 %s119, 1
        %s381 = smul.addr %s380, 16
        %s382 = scalar_lea.vmem [#allocation9], %s381
        // Predicated region
        $region53: #{tpu_custom_call.1} parent=43 // pred_check
          %p383 = pneg %p132
        $region54: #{tpu_custom_call.1} parent=43 // pred_check_branch
          %385 = sbr.rel (%p383) target = $region56
        $region55: #{tpu_custom_call.1} parent=43 // pred_region
          %386 = dma.done %s379, 256
        $region56: #{tpu_custom_call.1} parent=43 // pred_fallthru
          _
        %s387 = sand.u32 %s151, 1
        %s388 = scalar_lea.sflag [#allocation11], %s387
        %s389 = sand.u32 %s151, 1
        %s390 = smul.addr %s389, 16
        %s391 = scalar_lea.vmem [#allocation10], %s390
        // Predicated region
        $region57: #{tpu_custom_call.1} parent=43 // pred_check
          %p392 = pneg %p164
        $region58: #{tpu_custom_call.1} parent=43 // pred_check_branch
          %394 = sbr.rel (%p392) target = $region60
        $region59: #{tpu_custom_call.1} parent=43 // pred_region
          %395 = dma.done %s388, 256
        $region60: #{tpu_custom_call.1} parent=43 // pred_fallthru
          _
        %s396 = sand.u32 %s55, 1
        %s397 = scalar_lea.sflag [#allocation5], %s396
        %s398 = sand.u32 %s55, 1
        %s399 = smul.addr %s398, 16
        %s400 = scalar_lea.vmem [#allocation4], %s399
        %p401 = pneg %p68
        %p402 = pneg %p65
        %s403 = sand.u32 %s29, 1
        %s404 = scalar_lea.sflag [#allocation8], %s403
        %s405 = sand.u32 %s87, 1
        %s406 = smul.addr %s405, 16
        %s407 = scalar_lea.vmem [#allocation7], %s406
        %p408 = pneg %p100
        %p409 = pneg %p97
        %s410 = sand.u32 %s29, 1
        %s411 = scalar_lea.sflag [#allocation8], %s410
        %s412 = sand.u32 %s119, 1
        %s413 = smul.addr %s412, 16
        %s414 = scalar_lea.vmem [#allocation9], %s413
        %p415 = pneg %p132
        %p416 = pneg %p129
        %s417 = sand.u32 %s151, 1
        %s418 = scalar_lea.sflag [#allocation11], %s417
        %s419 = sand.u32 %s151, 1
        %s420 = smul.addr %s419, 16
        %s421 = scalar_lea.vmem [#allocation10], %s420
        %p422 = pneg %p164
        %p423 = pneg %p161
        %p424 = pneg %p185
        %p425 = pneg %p182
        %p426 = pneg %p206
        %p427 = pneg %p203
        %p428 = pneg %p232
        %p429 = pneg %p229
        %s430 = sand.u32 %s219, 1
        %s431 = scalar_lea.sflag [#allocation6], %s430
        %s432 = sand.u32 %s219, 1
        %s433 = smul.addr %s432, 8
        %s434 = scalar_lea.vmem [#allocation12], %s433
        %s435 = sadd.s32 %s33, %s34
        %p436 = scmp.lt.s32.totalorder %s435, 0
        %s437 = scalar_select %p436, %s435, 0
        %s438 = smul.u32 2, %s437
        %s439 = sadd.s32 %s33, %s34
        %p440 = scmp.lt.s32.totalorder %s439, 0
        %s441 = scalar_select %p440, %s439, 0
        %s442 = smul.u32 2, %s441
        %s443 = sadd.s32 %s33, %s34
        %p444 = scmp.lt.s32.totalorder %s443, 0
        %s445 = scalar_select %p444, %s443, 0
        %s446 = smul.u32 2, %s445
        %s447 = sadd.s32 %s33, %s34
        %p448 = scmp.lt.s32.totalorder %s447, 0
        %s449 = scalar_select %p448, %s447, 0
        %s450 = smul.u32 2, %s449
        %s451 = sadd.s32 %s33, %s34
        %p452 = scmp.eq.s32.totalorder %s34, 0
        // Predicated region
        $region61: #{tpu_custom_call.1} parent=43 // pred_check
          %p453 = pneg %p452
        $region62: #{tpu_custom_call.1} parent=43 // pred_check_branch
          %455 = sbr.rel (%p453) target = $region64
        $region63: #{tpu_custom_call.1} parent=43 // pred_region
          %456 = vst [vmem:[#allocation2] sm:$0xff] 0.0
          %457 = vst [vmem:[#allocation3] sm:$0xff] 0.0
        $region64: #{tpu_custom_call.1} parent=43 // pred_fallthru
          _
        %p458 = scmp.lt.s32.totalorder %s451, 1
        // Predicated region
        $region65: #{tpu_custom_call.1} parent=43 // pred_check
          %p459 = pneg %p458
        $region66: #{tpu_custom_call.1} parent=43 // pred_check_branch
          %461 = sbr.rel (%p459) target = $region68
        $region67: #{tpu_custom_call.1} parent=43 // pred_region
          %v462 = vld [vmem:[#allocation2] sm:$0xff]
          %v463 = vld [vmem:[%s382] sm:$0xff]
          %v464 = vld [vmem:[%s382 + $0x8] sm:$0xff]
          %v465 = vld [vmem:[%s364] sm:$0xff]
          %v466 = vld [vmem:[%s364 + $0x8] sm:$0xff]
          %v467 = vsub.f32 %v463, %v465
          %v468 = vsub.f32 %v464, %v466
          %v469 = vand.u32 2147483647, %v467
          %v470 = vand.u32 2147483647, %v468
          %v471 = vadd.f32 %v469, %v470
          %v472 = vadd.f32 %v462, %v471
          %473 = vst [vmem:[#allocation2] sm:$0xff] %v472
          %v474 = vld [vmem:[#allocation3] sm:$0xff]
          %v475 = vld [vmem:[%s391] sm:$0xff]
          %v476 = vld [vmem:[%s391 + $0x8] sm:$0xff]
          %v477 = vld [vmem:[%s373] sm:$0xff]
          %v478 = vld [vmem:[%s373 + $0x8] sm:$0xff]
          %v479 = vsub.f32 %v475, %v477
          %v480 = vsub.f32 %v476, %v478
          %v481 = vand.u32 2147483647, %v479
          %v482 = vand.u32 2147483647, %v480
          %v483 = vadd.f32 %v481, %v482
          %v484 = vadd.f32 %v474, %v483
          %485 = vst [vmem:[#allocation3] sm:$0xff] %v484
        $region68: #{tpu_custom_call.1} parent=43 // pred_fallthru
          _
        // Predicated region
        $region69: #{tpu_custom_call.1} parent=43 // pred_check
          %p486 = pneg %p452
        $region70: #{tpu_custom_call.1} parent=43 // pred_check_branch
          %488 = sbr.rel (%p486) target = $region72
        $region71: #{tpu_custom_call.1} parent=43 // pred_region
          %v489 = vld [vmem:[#allocation2] sm:$0xff]
          %490 = vadd.xlane.f32.xlu0 %v489
          %v491 = vpop.xlane.xlu0 %490
          %v492 = vrot.slane %v491, 4
          %v493 = vadd.f32 %v491, %v492
          %v494 = vrot.slane %v493, 2
          %v495 = vadd.f32 %v493, %v494
          %v496 = vrot.slane %v495, 1
          %v497 = vadd.f32 %v495, %v496
          %s498 = vtos %v497
          %s499 = smul.f32 %s498, 0.00048828125
          %v500 = vld [vmem:[#allocation3] sm:$0xff]
          %501 = vadd.xlane.f32.xlu0 %v500
          %v502 = vpop.xlane.xlu0 %501
          %v503 = vrot.slane %v502, 4
          %v504 = vadd.f32 %v502, %v503
          %v505 = vrot.slane %v504, 2
          %v506 = vadd.f32 %v504, %v505
          %v507 = vrot.slane %v506, 1
          %v508 = vadd.f32 %v506, %v507
          %s509 = vtos %v508
          %s510 = smul.f32 %s509, 0.00048828125
          %s511 = sadd.f32 %s499, %s510
          %v512 = vld [vmem:[%s4] sm:$0xff]
          %v513 = vsub.f32 %v512, 1.0
          %v514 = vld [vmem:[%s5] sm:$0xff]
          %v515 = vsub.f32 %v514, 1.0
          %v516 = vmul.f32 %v513, %v513
          %517 = vadd.xlane.f32.xlu0 %v516
          %v518 = vpop.xlane.xlu0 %517
          %v519 = vrot.slane %v518, 4
          %v520 = vadd.f32 %v518, %v519
          %v521 = vrot.slane %v520, 2
          %v522 = vadd.f32 %v520, %v521
          %v523 = vrot.slane %v522, 1
          %v524 = vadd.f32 %v522, %v523
          %s525 = vtos %v524
          %s526 = smul.f32 %s525, 0.001953125
          %v527 = vmul.f32 %v515, %v515
          %528 = vadd.xlane.f32.xlu0 %v527
          %v529 = vpop.xlane.xlu0 %528
          %v530 = vrot.slane %v529, 4
          %v531 = vadd.f32 %v529, %v530
          %v532 = vrot.slane %v531, 2
          %v533 = vadd.f32 %v531, %v532
          %v534 = vrot.slane %v533, 1
          %v535 = vadd.f32 %v533, %v534
          %s536 = vtos %v535
          %s537 = smul.f32 %s536, 0.001953125
          %s538 = sadd.f32 %s526, %s537
          %s539 = smul.f32 %s511, 10.0
          %p540 = scmp.eq.s32.totalorder %s33, 0
          %s541 = scalar_select %p540, %s538, 0.0
          %s542 = sadd.f32 %s539, %s541
          %v543 = vstv %s542
          %544 = vst [vmem:[%s434] sm:$0xff] %v543
        $region72: #{tpu_custom_call.1} parent=43 // pred_fallthru
          _
        %s545 = sand.u32 %s219, 1
        %s546 = scalar_lea.sflag [#allocation6], %s545
        %s547 = sand.u32 %s219, 1
        %s548 = smul.addr %s547, 8
        %s549 = scalar_lea.vmem [#allocation12], %s548
        // Predicated region
        $region73: #{tpu_custom_call.1} parent=43 // pred_check
          %p550 = pneg %p229
        $region74: #{tpu_custom_call.1} parent=43 // pred_check_branch
          %552 = sbr.rel (%p550) target = $region76
        $region75: #{tpu_custom_call.1} parent=43 // pred_region
          %s554 = ssub.s32 128, 128
          %555 = vsyncadd %s546, %s554
          %s556 = smul.addr %s33, 128
          %s557 = scalar_lea.hbm %s6, %s556
          %s559 = sshll.u32 %s549, 4
          %s560 = int_to_ptr.vmem [resolvable:$true] %s559
          %562 = dma.vmem_to_hbm [thread:$0]  %s560, 128, %s557, %s546
        $region76: #{tpu_custom_call.1} parent=43 // pred_fallthru
          _
      $region44: #{tpu_custom_call.1} parent=5 // pred_fallthru
        _
      %p563 = scmp.le.s32.totalorder 2, %s24
      // Predicated region
      $region77: #{tpu_custom_call.1} parent=5 // pred_check
        %p564 = pneg %p563
      $region78: #{tpu_custom_call.1} parent=5 // pred_check_branch
        %566 = sbr.rel (%p564) target = $region80
      $region79: #{tpu_custom_call.1} parent=5 // pred_region
        %s567 = ssub.s32 %s24, 2
        // Predicated region
        $region81: #{tpu_custom_call.1} parent=79 // pred_check
          %p568 = pneg %p235
        $region82: #{tpu_custom_call.1} parent=79 // pred_check_branch
          %570 = sbr.rel (%p568) target = $region84
        $region83: #{tpu_custom_call.1} parent=79 // pred_region
          %s571 = sand.u32 %s220, 1
          %s572 = scalar_lea.sflag [#allocation6], %s571
          %s573 = sand.u32 %s220, 1
          %s574 = smul.addr %s573, 8
          %s575 = scalar_lea.vmem [#allocation12], %s574
          %576 = dma.done %s572, 128
        $region84: #{tpu_custom_call.1} parent=79 // pred_fallthru
          _
      $region80: #{tpu_custom_call.1} parent=5 // pred_fallthru
        _
    $region6: #{tpu_custom_call.1} parent=1 // loop_footer
      %s28 = sadd.s32 1, %s24
    $region7: #{tpu_custom_call.1} parent=1 // loop_footer_branch
      %23 = sbr.rel target = $region3
    $region8: #{tpu_custom_call.1} parent=1 // loop_exit
      _
    %577 = vsyncpa [#allocation5], 1
    %s578 = scalar_lea.sflag [#allocation5], 1
    %579 = vsyncpa %s578, 1
    %580 = vsyncpa [#allocation8], 1
    %s581 = scalar_lea.sflag [#allocation8], 1
    %582 = vsyncpa %s581, 1
    %583 = vsyncpa [#allocation11], 1
    %s584 = scalar_lea.sflag [#allocation11], 1
    %585 = vsyncpa %s584, 1
    %586 = vsyncpa [#allocation6], 1
    %s587 = scalar_lea.sflag [#allocation6], 1
    %588 = vsyncpa %s587, 1

</llo_original>
